<compile_context>
chip_gen: v7x
topology: tpu7x:2x2x1
jax: 0.10.0
libtpu: 0.0.40
codegen_flags: <defaults>
</compile_context>

<pallas_src>
import jax
import jax.numpy as jnp
from jax.experimental import pallas as pl
from jax.experimental.pallas import tpu as pltpu

MAX_TILE_B = 1024   # largest batch tile (lane axis); sweep 512/1024/2048 if desired
LANE = 128          # lane quantum


def _mlp_kernel(xT_ref, w1T_ref, b1T_ref, w2_ref, b2_ref, p_ref, lbl_ref):
    """One batch tile, batch on the lane axis.

    xT_ref : (D_in, TILE_B) f32   activations, lane-dense rows
    w1T_ref: (H1, D_in)     f32   == PyTorch linear.weight
    b1T_ref: (H1, 1)        f32
    w2_ref : (H1, 1)        f32   == PyTorch linear2.weight.T   (output_size == 1)
    b2_ref : (1, 1)         f32
    p_ref  : (1, TILE_B)    f32   sigmoid probabilities
    lbl_ref: (1, TILE_B)    int8  (z >= 0) labels
    """
    xT = xT_ref[...]                                   # (D_in, TILE_B)
    w1T = w1T_ref[...]                                 # (H1, D_in)
    d_in = w1T.shape[1]

    # ---- Layer 1 on the VPU: K = D_in is tiny, MXU would be >98% padding ----
    hT = w1T[:, 0:1] * xT[0:1, :]                      # (H1, TILE_B) outer product
    for k in range(1, d_in):                           # static, unrolled
        hT = hT + w1T[:, k:k + 1] * xT[k:k + 1, :]
    hT = jax.nn.sigmoid(hT + b1T_ref[...])             # bias broadcast + EUP sigmoid

    # ---- Layer 2: w2-weighted sublane reduce (VPU mul + XLU reduce) ----
    z = jnp.sum(hT * w2_ref[...], axis=0, keepdims=True) + b2_ref[...]   # (1, TILE_B)

    p_ref[...] = jax.nn.sigmoid(z).astype(p_ref.dtype)          # lane-dense store
    # sigmoid(z) >= 0.5  <=>  z >= 0 : exact threshold on the logit, int8 labels.
    lbl_ref[...] = (z >= 0.0).astype(lbl_ref.dtype)


def _mlp_padded(xT, w1T, b1T, w2_col, b2, tile_b):
    """xT: (D_in, Bp) with Bp % tile_b == 0; returns ((1, Bp) f32, (1, Bp) i8)."""
    d_in, bp = xT.shape
    h1 = w1T.shape[0]
    nb = bp // tile_b

    flops = 2 * bp * h1 * (d_in + 1)                   # layer1 MACs + layer2 reduce
    transcendentals = bp * (h1 + 1)                    # sigmoids
    bytes_accessed = (xT.size * 4                      # activations in
                      + bp * (4 + 1)                   # probs f32 + labels i8 out
                      + (w1T.size + b1T.size + w2_col.size + b2.size) * 4)

    return pl.pallas_call(
        _mlp_kernel,
        out_shape=(jax.ShapeDtypeStruct((1, bp), jnp.float32),
                   jax.ShapeDtypeStruct((1, bp), jnp.int8)),
        grid=(nb,),
        in_specs=[
            pl.BlockSpec((d_in, tile_b), lambda i: (0, i)),   # lane-dense activation tile
            pl.BlockSpec((h1, d_in), lambda i: (0, 0)),       # weights stay VMEM-resident
            pl.BlockSpec((h1, 1), lambda i: (0, 0)),
            pl.BlockSpec((h1, 1), lambda i: (0, 0)),
            pl.BlockSpec((1, 1), lambda i: (0, 0)),
        ],
        out_specs=(pl.BlockSpec((1, tile_b), lambda i: (0, i)),
                   pl.BlockSpec((1, tile_b), lambda i: (0, i))),
        compiler_params=pltpu.CompilerParams(
            dimension_semantics=("parallel",),                # v7x shards batch tiles
        ),
        cost_estimate=pl.CostEstimate(flops=flops,
                                      transcendentals=transcendentals,
                                      bytes_accessed=bytes_accessed),
    )(xT, w1T, b1T, w2_col, b2)


def _choose_tile(batch):
    """Largest lane-dense tile up to MAX_TILE_B; keeps >=2 tiles only when the
    batch actually exceeds the tile (v7x megacore), single tile otherwise."""
    bp = pl.cdiv(max(batch, 1), LANE) * LANE
    return bp if bp <= MAX_TILE_B else MAX_TILE_B


def _mlp_run(x, w1T, b1T, w2_col, b2):
    """x: (B, D_in). Returns (probs (B,1) f32, labels (B,1) i8)."""
    b = x.shape[0]
    tile_b = _choose_tile(b)
    bp = pl.cdiv(b, tile_b) * tile_b
    xT = x.T                                            # (D_in, B): lane-dense rows
    if bp != b:
        xT = jnp.pad(xT, ((0, 0), (0, bp - b)))         # padded columns are inert
    probs, labels = _mlp_padded(xT, w1T, b1T, w2_col, b2, tile_b)
    return probs[0, :b].reshape(b, 1), labels[0, :b].reshape(b, 1)


@jax.jit
def mlp_forward(x, w1T, b1T, w2_col, b2):
    return _mlp_run(x, w1T, b1T, w2_col, b2)[0]


@jax.jit
def mlp_predict_labels(x, w1T, b1T, w2_col, b2):
    return _mlp_run(x, w1T, b1T, w2_col, b2)[1]


class PallasModel:
    """Mirror of the PyTorch Model(input_size, H1, output_size)."""

    def __init__(self, input_size, H1, output_size, key):
        # TODO(synk): the kernel specializes the output_size == 1 case (the one
        # Model.predict uses); >1 outputs would need per-column reduces.
        assert output_size == 1, "kernel specializes output_size == 1"
        k1, k2, k3, k4 = jax.random.split(key, 4)
        bound1 = 1.0 / (input_size ** 0.5)
        bound2 = 1.0 / (H1 ** 0.5)
        self.out_features = output_size
        # PyTorch nn.Linear layout (out, in) is exactly what the kernel wants.
        self.w1T = jax.random.uniform(k1, (H1, input_size), jnp.float32, -bound1, bound1)
        self.b1T = jax.random.uniform(k2, (H1, 1), jnp.float32, -bound1, bound1)
        self.w2_col = jax.random.uniform(k3, (H1, 1), jnp.float32, -bound2, bound2)
        self.b2 = jax.random.uniform(k4, (1, 1), jnp.float32, -bound2, bound2)

    def forward(self, x):
        return mlp_forward(x, self.w1T, self.b1T, self.w2_col, self.b2)

    def predict(self, x_single):
        # Matches Model.predict: single example, 0.5 threshold -> python int.
        labels = mlp_predict_labels(x_single.reshape(1, -1), self.w1T, self.b1T,
                                    self.w2_col, self.b2)
        return int(labels[0, 0])

    def predict_batch(self, x):
        # Preferred path: one kernel launch + one (int8) host pull for the batch.
        return jax.device_get(
            mlp_predict_labels(x, self.w1T, self.b1T, self.w2_col, self.b2))


if __name__ == "__main__":
    key = jax.random.PRNGKey(0)
    k_model, k_x = jax.random.split(key)

    input_size, H1, output_size = 2, 32, 1   # 2-D points -> 1 probability
    batch = 8

    model = PallasModel(input_size, H1, output_size, k_model)
    x = jax.random.normal(k_x, (batch, input_size), jnp.float32)

    out = jax.block_until_ready(model.forward(x))

    # Reference check in plain JAX to validate the kernel semantics.
    h_ref = jax.nn.sigmoid(x @ model.w1T.T + model.b1T.T)        # (B, H1)
    z_ref = h_ref @ model.w2_col + model.b2                      # (B, 1) logits
    y_ref = jax.nn.sigmoid(z_ref)
    assert out.shape == (batch, output_size)
    assert jnp.allclose(out, y_ref, atol=1e-5), "mismatch vs reference"

    # predict() (single sample, exercises the B=1 -> 128 padding path) and
    # batched predict (int8 labels thresholded on the logit inside the kernel).
    p_single = model.predict(x[0])
    p_batch = model.predict_batch(x)
    ref_labels = (jax.device_get(z_ref) >= 0.0).astype("int8")
    assert p_single in (0, 1)
    assert p_batch.dtype == jnp.int8
    assert (p_batch.reshape(-1) == ref_labels.reshape(-1)).all()
    assert p_single == int(p_batch[0, 0])

    print("KERNEL_OK")
</pallas_src>

<mosaic_0001>
module attributes {stable_mosaic.version = 11 : i64} {
  func.func @_mlp_kernel(%arg0: i32, %arg1: memref<2x128xf32, #tpu.memory_space<vmem>>, %arg2: memref<32x2xf32, #tpu.memory_space<vmem>>, %arg3: memref<32x1xf32, #tpu.memory_space<vmem>>, %arg4: memref<32x1xf32, #tpu.memory_space<vmem>>, %arg5: memref<1x1xf32, #tpu.memory_space<vmem>>, %arg6: memref<1x128xf32, #tpu.memory_space<vmem>>, %arg7: memref<1x128xi8, #tpu.memory_space<vmem>>) attributes {dimension_semantics = [#tpu.dimension_semantics<parallel>], iteration_bounds = array<i64: 1>, scalar_prefetch = 0 : i64, scratch_operands = 0 : i64, tpu.core_type = #tpu.core_type<tc>, window_params = [{transform_indices = @transform_0, window_bounds = array<i64: 2, 128>}, {pipeline_mode = #tpu.pipeline_mode<synchronous>, transform_indices = @transform_1, window_bounds = array<i64: 32, 2>}, {pipeline_mode = #tpu.pipeline_mode<synchronous>, transform_indices = @transform_2, window_bounds = array<i64: 32, 1>}, {pipeline_mode = #tpu.pipeline_mode<synchronous>, transform_indices = @transform_3, window_bounds = array<i64: 32, 1>}, {pipeline_mode = #tpu.pipeline_mode<synchronous>, transform_indices = @transform_4, window_bounds = array<i64: 1, 1>}, {transform_indices = @transform_5, window_bounds = array<i64: 1, 128>}, {transform_indices = @transform_6, window_bounds = array<i64: 1, 128>}]} {
    %c0 = arith.constant 0 : index
    %c0_0 = arith.constant 0 : index
    %0 = vector.load %arg1[%c0, %c0_0] : memref<2x128xf32, #tpu.memory_space<vmem>>, vector<2x128xf32>
    %c0_1 = arith.constant 0 : index
    %c0_2 = arith.constant 0 : index
    %1 = vector.load %arg2[%c0_1, %c0_2] : memref<32x2xf32, #tpu.memory_space<vmem>>, vector<32x2xf32>
    %2 = vector.extract_strided_slice %1 {offsets = [0, 0], sizes = [32, 1], strides = [1, 1]} : vector<32x2xf32> to vector<32x1xf32>
    %3 = vector.extract_strided_slice %0 {offsets = [0, 0], sizes = [1, 128], strides = [1, 1]} : vector<2x128xf32> to vector<1x128xf32>
    %4 = vector.broadcast %2 : vector<32x1xf32> to vector<32x128xf32>
    %5 = vector.broadcast %3 : vector<1x128xf32> to vector<32x128xf32>
    %6 = arith.mulf %4, %5 : vector<32x128xf32>
    %7 = vector.extract_strided_slice %1 {offsets = [0, 1], sizes = [32, 1], strides = [1, 1]} : vector<32x2xf32> to vector<32x1xf32>
    %8 = vector.extract_strided_slice %0 {offsets = [1, 0], sizes = [1, 128], strides = [1, 1]} : vector<2x128xf32> to vector<1x128xf32>
    %9 = vector.broadcast %7 : vector<32x1xf32> to vector<32x128xf32>
    %10 = vector.broadcast %8 : vector<1x128xf32> to vector<32x128xf32>
    %11 = arith.mulf %9, %10 : vector<32x128xf32>
    %12 = arith.addf %6, %11 : vector<32x128xf32>
    %c0_3 = arith.constant 0 : index
    %c0_4 = arith.constant 0 : index
    %13 = vector.load %arg3[%c0_3, %c0_4] : memref<32x1xf32, #tpu.memory_space<vmem>>, vector<32x1xf32>
    %14 = vector.broadcast %13 : vector<32x1xf32> to vector<32x128xf32>
    %15 = arith.addf %12, %14 : vector<32x128xf32>
    %16 = arith.negf %15 : vector<32x128xf32>
    %17 = math.exp %16 : vector<32x128xf32>
    %cst = arith.constant 1.000000e+00 : f32
    %18 = vector.broadcast %cst : f32 to vector<32x128xf32>
    %19 = arith.addf %18, %17 : vector<32x128xf32>
    %20 = arith.divf %18, %19 : vector<32x128xf32>
    %c0_5 = arith.constant 0 : index
    %c0_6 = arith.constant 0 : index
    %21 = vector.load %arg4[%c0_5, %c0_6] : memref<32x1xf32, #tpu.memory_space<vmem>>, vector<32x1xf32>
    %22 = vector.broadcast %21 : vector<32x1xf32> to vector<32x128xf32>
    %23 = arith.mulf %20, %22 : vector<32x128xf32>
    %cst_7 = arith.constant dense<0.000000e+00> : vector<128xf32>
    %24 = vector.multi_reduction <add>, %23, %cst_7 [0] : vector<32x128xf32> to vector<128xf32>
    %25 = vector.shape_cast %24 : vector<128xf32> to vector<1x128xf32>
    %c0_8 = arith.constant 0 : index
    %c0_9 = arith.constant 0 : index
    %26 = vector.load %arg5[%c0_8, %c0_9] : memref<1x1xf32, #tpu.memory_space<vmem>>, vector<1x1xf32>
    %27 = vector.broadcast %26 : vector<1x1xf32> to vector<1x128xf32>
    %28 = arith.addf %25, %27 : vector<1x128xf32>
    %29 = arith.negf %28 : vector<1x128xf32>
    %30 = math.exp %29 : vector<1x128xf32>
    %cst_10 = arith.constant 1.000000e+00 : f32
    %31 = vector.broadcast %cst_10 : f32 to vector<1x128xf32>
    %32 = arith.addf %31, %30 : vector<1x128xf32>
    %33 = arith.divf %31, %32 : vector<1x128xf32>
    %c0_11 = arith.constant 0 : index
    %c0_12 = arith.constant 0 : index
    %34 = vector.load %arg6[%c0_11, %c0_12] : memref<1x128xf32, #tpu.memory_space<vmem>>, vector<1x128xf32>
    tpu.vector_store %arg6[%c0_11, %c0_12], %33 {strides = array<i32>} : memref<1x128xf32, #tpu.memory_space<vmem>>, vector<1x128xf32>,
    %cst_13 = arith.constant 0.000000e+00 : f32
    %35 = vector.broadcast %cst_13 : f32 to vector<1x128xf32>
    %36 = arith.cmpf oge, %28, %35 : vector<1x128xf32>
    %37 = arith.extui %36 : vector<1x128xi1> to vector<1x128xi8>
    %c0_14 = arith.constant 0 : index
    %c0_15 = arith.constant 0 : index
    %38 = vector.load %arg7[%c0_14, %c0_15] : memref<1x128xi8, #tpu.memory_space<vmem>>, vector<1x128xi8>
    tpu.vector_store %arg7[%c0_14, %c0_15], %37 {strides = array<i32>} : memref<1x128xi8, #tpu.memory_space<vmem>>, vector<1x128xi8>,
    return
  }
  func.func @transform_0(%arg0: i32) -> (i32, i32) {
    %c0_i32 = arith.constant 0 : i32
    %c0_i32_0 = arith.constant 0 : i32
    return %c0_i32, %arg0 : i32, i32
  }
  func.func @transform_1(%arg0: i32) -> (i32, i32) {
    %c0_i32 = arith.constant 0 : i32
    %c0_i32_0 = arith.constant 0 : i32
    %c0_i32_1 = arith.constant 0 : i32
    return %c0_i32, %c0_i32_0 : i32, i32
  }
  func.func @transform_2(%arg0: i32) -> (i32, i32) {
    %c0_i32 = arith.constant 0 : i32
    %c0_i32_0 = arith.constant 0 : i32
    %c0_i32_1 = arith.constant 0 : i32
    return %c0_i32, %c0_i32_0 : i32, i32
  }
  func.func @transform_3(%arg0: i32) -> (i32, i32) {
    %c0_i32 = arith.constant 0 : i32
    %c0_i32_0 = arith.constant 0 : i32
    %c0_i32_1 = arith.constant 0 : i32
    return %c0_i32, %c0_i32_0 : i32, i32
  }
  func.func @transform_4(%arg0: i32) -> (i32, i32) {
    %c0_i32 = arith.constant 0 : i32
    %c0_i32_0 = arith.constant 0 : i32
    %c0_i32_1 = arith.constant 0 : i32
    return %c0_i32, %c0_i32_0 : i32, i32
  }
  func.func @transform_5(%arg0: i32) -> (i32, i32) {
    %c0_i32 = arith.constant 0 : i32
    %c0_i32_0 = arith.constant 0 : i32
    return %c0_i32, %arg0 : i32, i32
  }
  func.func @transform_6(%arg0: i32) -> (i32, i32) {
    %c0_i32 = arith.constant 0 : i32
    %c0_i32_0 = arith.constant 0 : i32
    return %c0_i32, %arg0 : i32, i32
  }
}

</mosaic_0001>

<llo_original>
// kernel: mlp_forward.1
$region0: #{mlp_forward.1}
  #allocation0 [shape = 'u32[]', space=smem, size = 0x4, offset = 0x4, fixed_abs, tag = 'smem constant byte address 0x4 - core index']
  #allocation1 [shape = 'u32[144,128]{1,0:T(1,128)}', space=vmem, size = 0x12000, scoped, tag = 'internal scratch']
  #allocation2 [shape = 'f32[1,1]{1,0:T(1,128)S(1)}', space=vmem, size = 0x200, scoped, tag = 'scoped memory for mlp_forward.1']
  %s0 = inlined_call_operand.vmem [shape: f32[2,128], index: 0, kind: input, shape index: {}]
  %s1 = inlined_call_operand.vmem [shape: f32[32,2], index: 1, kind: input, shape index: {}]
  %s2 = inlined_call_operand.vmem [shape: f32[32,1], index: 2, kind: input, shape index: {}]
  %s3 = inlined_call_operand.vmem [shape: f32[32,1], index: 3, kind: input, shape index: {}]
  %s4 = inlined_call_operand.<no memory space> [shape: f32[1,1], index: 4, kind: input, shape index: {}]
  %s5 = inlined_call_operand.vmem [shape: f32[1,128], index: 5, kind: output, shape index: {0}]
  %s6 = inlined_call_operand.hbm [shape: s8[1,128], index: 6, kind: output, shape index: {1}]
  %7 = xla_tuple %s5, %s6
  %s8 = sld [smem:[#allocation0]]
  $region38: #{mlp_forward.1} parent=0
    _
  %s10 = ssub.s32 1, %s8
  %s11 = scalar_select 0, %s10, %s8
  %v12 = vstv %s4
  %13 = vst [vmem:[#allocation2] sm:$0x1] %v12
  $region1: #{mlp_forward.1} parent=0
    #allocation3 [shape = 'u8[512]{0}', space=vmem, size = 0x400, scoped, tag = 'output window, operand 1, single buffered']
    #allocation4 [shape = 's32[1]{0}', space=sflag, size = 0x4, scoped, tag = 'scoped memory for mlp_forward.1']
    %14 = vsyncpa [#allocation4], 0
    // Predicated region
    $region2: #{mlp_forward.1} parent=1 // pred_check
      _
    $region3: #{mlp_forward.1} parent=1 // pred_check_branch
      %16 = sbr.rel (0) target = $region5
    $region4: #{mlp_forward.1} parent=1 // pred_region
      _
    $region5: #{mlp_forward.1} parent=1 // pred_fallthru
      _
    // Predicated region
    $region6: #{mlp_forward.1} parent=1 // pred_check
      _
    $region7: #{mlp_forward.1} parent=1 // pred_check_branch
      %18 = sbr.rel (0) target = $region9
    $region8: #{mlp_forward.1} parent=1 // pred_region
      _
    $region9: #{mlp_forward.1} parent=1 // pred_fallthru
      _
    // Predicated region
    $region10: #{mlp_forward.1} parent=1 // pred_check
      _
    $region11: #{mlp_forward.1} parent=1 // pred_check_branch
      %20 = sbr.rel (0) target = $region13
    $region12: #{mlp_forward.1} parent=1 // pred_region
      _
    $region13: #{mlp_forward.1} parent=1 // pred_fallthru
      _
    // Predicated region
    $region14: #{mlp_forward.1} parent=1 // pred_check
      _
    $region15: #{mlp_forward.1} parent=1 // pred_check_branch
      %22 = sbr.rel (0) target = $region17
    $region16: #{mlp_forward.1} parent=1 // pred_region
      _
    $region17: #{mlp_forward.1} parent=1 // pred_fallthru
      _
    // Predicated region
    $region18: #{mlp_forward.1} parent=1 // pred_check
      _
    $region19: #{mlp_forward.1} parent=1 // pred_check_branch
      %24 = sbr.rel (0) target = $region21
    $region20: #{mlp_forward.1} parent=1 // pred_region
      _
    $region21: #{mlp_forward.1} parent=1 // pred_fallthru
      _
    %v27 = vld [vmem:[%s0] sm:$0x3]
    %v28 = vld [vmem:[%s1] sm:$0xff]
    %v29 = vld [vmem:[%s1 + $0x8] sm:$0xff]
    %v30 = vld [vmem:[%s1 + $0x10] sm:$0xff]
    %v31 = vld [vmem:[%s1 + $0x18] sm:$0xff]
    %33 = vset.pattern.permute.xlu0 0
    %34 = vperm.xlu0 %33, %v28
    %v35 = vpop.permute.xlu0 %34
    %38 = vset.pattern.permute.xlu0 0
    %39 = vperm.xlu0 %38, %v29
    %v40 = vpop.permute.xlu0 %39
    %43 = vset.pattern.permute.xlu0 0
    %44 = vperm.xlu0 %43, %v30
    %v45 = vpop.permute.xlu0 %44
    %48 = vset.pattern.permute.xlu0 0
    %49 = vperm.xlu0 %48, %v31
    %v50 = vpop.permute.xlu0 %49
    %v52 = vlaneseq
    %v53 = vshrl.u32 %v52, 7
    %v54 = vsub.s32 0, %v53
    %v55 = vrot.slane %v27, %v54
    %v56 = vmul.f32 %v35, %v55
    %v57 = vmul.f32 %v40, %v55
    %v58 = vmul.f32 %v45, %v55
    %v59 = vmul.f32 %v50, %v55
    %60 = vset.pattern.permute.xlu0 1
    %61 = vperm.xlu0 %60, %v28
    %v62 = vpop.permute.xlu0 %61
    %64 = vset.pattern.permute.xlu0 1
    %65 = vperm.xlu0 %64, %v29
    %v66 = vpop.permute.xlu0 %65
    %68 = vset.pattern.permute.xlu0 1
    %69 = vperm.xlu0 %68, %v30
    %v70 = vpop.permute.xlu0 %69
    %72 = vset.pattern.permute.xlu0 1
    %73 = vperm.xlu0 %72, %v31
    %v74 = vpop.permute.xlu0 %73
    %v76 = vlaneseq
    %v77 = vshrl.u32 %v76, 7
    %v78 = vsub.s32 1, %v77
    %v79 = vrot.slane %v27, %v78
    %v80 = vmul.f32 %v62, %v79
    %v81 = vmul.f32 %v66, %v79
    %v82 = vmul.f32 %v70, %v79
    %v83 = vmul.f32 %v74, %v79
    %v84 = vadd.f32 %v56, %v80
    %v85 = vadd.f32 %v57, %v81
    %v86 = vadd.f32 %v58, %v82
    %v87 = vadd.f32 %v59, %v83
    %v88 = vld [vmem:[%s2] sm:$0xff]
    %v89 = vld [vmem:[%s2 + $0x8] sm:$0xff]
    %v90 = vld [vmem:[%s2 + $0x10] sm:$0xff]
    %v91 = vld [vmem:[%s2 + $0x18] sm:$0xff]
    %93 = vset.pattern.permute.xlu0 0
    %94 = vperm.xlu0 %93, %v88
    %v95 = vpop.permute.xlu0 %94
    %98 = vset.pattern.permute.xlu0 0
    %99 = vperm.xlu0 %98, %v89
    %v100 = vpop.permute.xlu0 %99
    %103 = vset.pattern.permute.xlu0 0
    %104 = vperm.xlu0 %103, %v90
    %v105 = vpop.permute.xlu0 %104
    %108 = vset.pattern.permute.xlu0 0
    %109 = vperm.xlu0 %108, %v91
    %v110 = vpop.permute.xlu0 %109
    %v112 = vadd.f32 %v84, %v95
    %v113 = vadd.f32 %v85, %v100
    %v114 = vadd.f32 %v86, %v105
    %v115 = vadd.f32 %v87, %v110
    %v116 = vxor.u32 %v112, 2147483648
    %v117 = vxor.u32 %v113, 2147483648
    %v118 = vxor.u32 %v114, 2147483648
    %v119 = vxor.u32 %v115, 2147483648
    %v120 = vmul.f32 %v116, 1.442695
    %v121 = vpow.pop %v120
    %v122 = vmul.f32 %v117, 1.442695
    %v123 = vpow.pop %v122
    %v124 = vmul.f32 %v118, 1.442695
    %v125 = vpow.pop %v124
    %v126 = vmul.f32 %v119, 1.442695
    %v127 = vpow.pop %v126
    %v128 = vadd.f32 %v121, 1.0
    %v129 = vadd.f32 %v123, 1.0
    %v130 = vadd.f32 %v125, 1.0
    %v131 = vadd.f32 %v127, 1.0
    %v132 = vrcp.pop %v128
    %v133 = vmul.f32 1.0, %v132
    %v134 = vrcp.pop %v129
    %v135 = vmul.f32 1.0, %v134
    %v136 = vrcp.pop %v130
    %v137 = vmul.f32 1.0, %v136
    %v138 = vrcp.pop %v131
    %v139 = vmul.f32 1.0, %v138
    %v140 = vld [vmem:[%s3] sm:$0xff]
    %v141 = vld [vmem:[%s3 + $0x8] sm:$0xff]
    %v142 = vld [vmem:[%s3 + $0x10] sm:$0xff]
    %v143 = vld [vmem:[%s3 + $0x18] sm:$0xff]
    %145 = vset.pattern.permute.xlu0 0
    %146 = vperm.xlu0 %145, %v140
    %v147 = vpop.permute.xlu0 %146
    %150 = vset.pattern.permute.xlu0 0
    %151 = vperm.xlu0 %150, %v141
    %v152 = vpop.permute.xlu0 %151
    %155 = vset.pattern.permute.xlu0 0
    %156 = vperm.xlu0 %155, %v142
    %v157 = vpop.permute.xlu0 %156
    %160 = vset.pattern.permute.xlu0 0
    %161 = vperm.xlu0 %160, %v143
    %v162 = vpop.permute.xlu0 %161
    %v164 = vmul.f32 %v133, %v147
    %v165 = vmul.f32 %v135, %v152
    %v166 = vmul.f32 %v137, %v157
    %v167 = vmul.f32 %v139, %v162
    %v168 = vadd.f32 %v164, %v165
    %v169 = vadd.f32 %v168, %v166
    %v170 = vadd.f32 %v169, %v167
    %v171 = vrot.slane %v170, 4
    %v172 = vadd.f32 %v170, %v171
    %v173 = vrot.slane %v172, 2
    %v174 = vadd.f32 %v172, %v173
    %v175 = vrot.slane %v174, 1
    %v176 = vadd.f32 %v174, %v175
    %v177 = vld [vmem:[#allocation2] sm:$0x1]
    %179 = vset.pattern.permute.xlu0 0
    %180 = vperm.xlu0 %179, %v177
    %v181 = vpop.permute.xlu0 %180
    %v183 = vlaneseq
    %v184 = vshrl.u32 %v183, 7
    %v185 = vsub.s32 0, %v184
    %v186 = vrot.slane %v181, %v185
    %v187 = vadd.f32 %v176, %v186
    %v188 = vxor.u32 %v187, 2147483648
    %v189 = vmul.f32 %v188, 1.442695
    %v190 = vpow.pop %v189
    %v191 = vadd.f32 %v190, 1.0
    %v192 = vrcp.pop %v191
    %v193 = vmul.f32 1.0, %v192
    %194 = vst [vmem:[%s5] sm:$0x1] %v193
    %vm195 = vcmp.ge.f32.partialorder %v187, 0.0
    %vm196 = vmpackc.low %vm195, %vm195
    %vm197 = vmpackc.even %vm196, %vm196
    %v198 = vsel %vm197, 16843009, 0
    %vm199 = vcmask 1040384
    %vm200 = vsmask.f32 0
    %vm201 = vmand %vm199, %vm200
    %v202 = vld [vmem:[#allocation3] sm:$0x1]
    %v203 = vsel %vm201, %v198, %v202
    %204 = vst [vmem:[#allocation3] sm:$0x1] %v203
    // Predicated region
    $region22: #{mlp_forward.1} parent=1 // pred_check
      _
    $region23: #{mlp_forward.1} parent=1 // pred_check_branch
      %206 = sbr.rel (0) target = $region25
    $region24: #{mlp_forward.1} parent=1 // pred_region
      _
    $region25: #{mlp_forward.1} parent=1 // pred_fallthru
      _
    // Predicated region
    $region26: #{mlp_forward.1} parent=1 // pred_check
      _
    $region27: #{mlp_forward.1} parent=1 // pred_check_branch
      %208 = sbr.rel (0) target = $region29
    $region28: #{mlp_forward.1} parent=1 // pred_region
      %s210 = ssub.s32 16, 16
      %211 = vsyncadd [#allocation4], %s210
      %s213 = sshll.u32 [#allocation3], 4
      %s214 = int_to_ptr.vmem [resolvable:$true] %s213
      %216 = dma.vmem_to_hbm [thread:$0]  %s214, 16, %s6, [#allocation4]
    $region29: #{mlp_forward.1} parent=1 // pred_fallthru
      _
    // Predicated region
    $region30: #{mlp_forward.1} parent=1 // pred_check
      _
    $region31: #{mlp_forward.1} parent=1 // pred_check_branch
      %218 = sbr.rel (0) target = $region33
    $region32: #{mlp_forward.1} parent=1 // pred_region
      _
    $region33: #{mlp_forward.1} parent=1 // pred_fallthru
      _
    // Predicated region
    $region34: #{mlp_forward.1} parent=1 // pred_check
      _
    $region35: #{mlp_forward.1} parent=1 // pred_check_branch
      %220 = sbr.rel (0) target = $region37
    $region36: #{mlp_forward.1} parent=1 // pred_region
      %221 = dma.done [#allocation4], 16
    $region37: #{mlp_forward.1} parent=1 // pred_fallthru
      _
    %222 = vsyncpa [#allocation4], 1

</llo_original>
